<compile_context>
chip_gen: v6e
topology: v6e:2x2x1
jax: 0.10.0
libtpu: 0.0.40
codegen_flags: <defaults>
</compile_context>

<pallas_src>
import jax
import jax.numpy as jnp
from jax.experimental import pallas as pl
from jax.experimental.pallas import tpu as pltpu


# ----------------------------------------------------------------------------- kernel

def identity_mapping_kernel(x_ref, w_ref, b_ref, o_ref):
    # y[n] = sum_f x[f, n] * w[f] + b
    x = x_ref[...].astype(jnp.float32)              # (F, TN)  upcast in-kernel
    w = w_ref[...]                                  # (F, 1)   broadcasts over lanes
    y = jnp.sum(x * w, axis=0, keepdims=True)       # (1, TN)  sublane reduce (XLU)
    o_ref[...] = y + b_ref[0, 0]                    # scalar bias from SMEM


# ----------------------------------------------------------------------------- wrapper

def identity_mapping(x, weight, bias, *, tile_cols=1024):
    """x: (N, F), weight: (1, F) (PyTorch nn.Linear layout), bias: (1,). Returns (N, 1) f32."""
    N, F = x.shape
    assert weight.shape == (1, F) and bias.shape == (1,)

    LANE = 128
    # Lane-dense tile along the batch axis: multiple of 128, clamped to the problem size.
    tile = min(max(tile_cols, LANE), pl.cdiv(N, LANE) * LANE)
    tile = (tile // LANE) * LANE
    n_pad = pl.cdiv(N, tile) * tile

    # Present x as (F, N): batch on lanes, 17 features on sublanes.  Only the tail
    # remainder of the lane axis is padded (XLA fuses this with the transpose copy).
    xT = jnp.swapaxes(x, 0, 1)                      # (F, N), native dtype
    if n_pad != N:
        xT = jnp.pad(xT, ((0, 0), (0, n_pad - N)))

    wT = weight.astype(jnp.float32).T               # (F, 1)
    b2 = bias.astype(jnp.float32).reshape(1, 1)     # (1, 1) scalar -> SMEM

    out = pl.pallas_call(
        identity_mapping_kernel,
        out_shape=jax.ShapeDtypeStruct((1, n_pad), jnp.float32),
        grid=(n_pad // tile,),
        in_specs=[
            pl.BlockSpec((F, tile), lambda i: (0, i)),              # x tile (lane-dense)
            pl.BlockSpec((F, 1), lambda i: (0, 0)),                 # weight (shared)
            pl.BlockSpec(memory_space=pltpu.MemorySpace.SMEM),      # bias scalar
        ],
        out_specs=pl.BlockSpec((1, tile), lambda i: (0, i)),        # lane-dense store
        compiler_params=pltpu.CompilerParams(
            dimension_semantics=("parallel",)),
    )(xT, wT, b2)

    return out[0, :N].reshape(N, 1)


# ----------------------------------------------------------------------------- main

if __name__ == "__main__":
    key = jax.random.PRNGKey(0)
    F = 17

    # IdentityMapping.__init__: weight filled with 1, bias filled with 0.
    weight = jnp.ones((1, F), dtype=jnp.float32)
    bias = jnp.zeros((1,), dtype=jnp.float32)

    # Primary small case (batch of 16 keypoint vectors).
    N = 16
    x = jax.random.normal(key, (N, F), dtype=jnp.float32)
    out = identity_mapping(x, weight, bias)
    jax.block_until_ready(out)
    assert out.shape == (N, 1) and out.dtype == jnp.float32
    ref = x @ weight.T + bias
    assert jnp.allclose(out, ref, rtol=1e-5, atol=1e-5)

    # Second check exercising tail padding on the lane axis.
    N2 = 200
    x2 = jax.random.normal(jax.random.PRNGKey(1), (N2, F), dtype=jnp.float32)
    out2 = identity_mapping(x2, weight, bias)
    jax.block_until_ready(out2)
    ref2 = x2 @ weight.T + bias
    assert out2.shape == (N2, 1)
    assert jnp.allclose(out2, ref2, rtol=1e-5, atol=1e-5)

    print("KERNEL_OK")
</pallas_src>

<mosaic_0001>
module attributes {stable_mosaic.version = 11 : i64} {
  func.func @identity_mapping_kernel(%arg0: i32, %arg1: memref<17x128xf32, #tpu.memory_space<vmem>>, %arg2: memref<17x1xf32, #tpu.memory_space<vmem>>, %arg3: memref<1x1xf32, #tpu.memory_space<smem>>, %arg4: memref<1x128xf32, #tpu.memory_space<vmem>>) attributes {dimension_semantics = [#tpu.dimension_semantics<parallel>], iteration_bounds = array<i64: 1>, scalar_prefetch = 0 : i64, scratch_operands = 0 : i64, tpu.core_type = #tpu.core_type<tc>, window_params = [{transform_indices = @transform_0, window_bounds = array<i64: 17, 128>}, {pipeline_mode = #tpu.pipeline_mode<synchronous>, transform_indices = @transform_1, window_bounds = array<i64: 17, 1>}, {transform_indices = @transform_2, window_bounds = array<i64: 1, 1>}, {transform_indices = @transform_3, window_bounds = array<i64: 1, 128>}]} {
    %c0 = arith.constant 0 : index
    %c0_0 = arith.constant 0 : index
    %0 = vector.load %arg1[%c0, %c0_0] : memref<17x128xf32, #tpu.memory_space<vmem>>, vector<17x128xf32>
    %c0_1 = arith.constant 0 : index
    %c0_2 = arith.constant 0 : index
    %1 = vector.load %arg2[%c0_1, %c0_2] : memref<17x1xf32, #tpu.memory_space<vmem>>, vector<17x1xf32>
    %2 = vector.broadcast %1 : vector<17x1xf32> to vector<17x128xf32>
    %3 = arith.mulf %0, %2 : vector<17x128xf32>
    %cst = arith.constant dense<0.000000e+00> : vector<128xf32>
    %4 = vector.multi_reduction <add>, %3, %cst [0] : vector<17x128xf32> to vector<128xf32>
    %5 = vector.shape_cast %4 : vector<128xf32> to vector<1x128xf32>
    %c0_3 = arith.constant 0 : index
    %c0_4 = arith.constant 0 : index
    %6 = memref.load %arg3[%c0_3, %c0_4] : memref<1x1xf32, #tpu.memory_space<smem>>
    %7 = vector.broadcast %6 : f32 to vector<1x128xf32>
    %8 = arith.addf %5, %7 : vector<1x128xf32>
    %c0_5 = arith.constant 0 : index
    %c0_6 = arith.constant 0 : index
    %9 = vector.load %arg4[%c0_5, %c0_6] : memref<1x128xf32, #tpu.memory_space<vmem>>, vector<1x128xf32>
    tpu.vector_store %arg4[%c0_5, %c0_6], %8 {strides = array<i32>} : memref<1x128xf32, #tpu.memory_space<vmem>>, vector<1x128xf32>,
    return
  }
  func.func @transform_0(%arg0: i32) -> (i32, i32) {
    %c0_i32 = arith.constant 0 : i32
    %c0_i32_0 = arith.constant 0 : i32
    return %c0_i32, %arg0 : i32, i32
  }
  func.func @transform_1(%arg0: i32) -> (i32, i32) {
    %c0_i32 = arith.constant 0 : i32
    %c0_i32_0 = arith.constant 0 : i32
    %c0_i32_1 = arith.constant 0 : i32
    return %c0_i32, %c0_i32_0 : i32, i32
  }
  func.func @transform_2(%arg0: i32) -> (i32, i32) {
    %c0_i32 = arith.constant 0 : i32
    %c0_i32_0 = arith.constant 0 : i32
    %c0_i32_1 = arith.constant 0 : i32
    return %c0_i32, %c0_i32_0 : i32, i32
  }
  func.func @transform_3(%arg0: i32) -> (i32, i32) {
    %c0_i32 = arith.constant 0 : i32
    %c0_i32_0 = arith.constant 0 : i32
    return %c0_i32, %arg0 : i32, i32
  }
}

</mosaic_0001>

<llo_original>
// kernel: tpu_custom_call.1
$region0: #{tpu_custom_call.1}
  #allocation0 [shape = 'u32[]', space=smem, size = 0x4, offset = 0x4, fixed_abs, tag = 'smem constant byte address 0x4 - core index']
  #allocation1 [shape = 'u32[144,128]{1,0:T(1,128)}', space=vmem, size = 0x12000, scoped, tag = 'internal scratch']
  #allocation2 [shape = 'f32[1,1]{1,0:T(1,128)S(6)}', space=smem, size = 0x200, scoped, tag = 'scoped memory for tpu_custom_call.1']
  %s0 = inlined_call_operand.vmem [shape: f32[17,128], index: 0, kind: input, shape index: {}]
  %s1 = inlined_call_operand.vmem [shape: f32[17,1], index: 1, kind: input, shape index: {}]
  %s2 = inlined_call_operand.<no memory space> [shape: f32[1,1], index: 2, kind: input, shape index: {}]
  %s3 = inlined_call_operand.hbm [shape: f32[1,128], index: 3, kind: output, shape index: {}]
  %s4 = sld [smem:[#allocation0]]
  $region22: #{tpu_custom_call.1} parent=0
    _
  %s6 = ssub.s32 1, %s4
  %s7 = scalar_select 0, %s6, %s4
  %8 = sst [smem:[#allocation2]] %s2
  $region1: #{tpu_custom_call.1} parent=0
    #allocation3 [shape = 'u8[512]{0}', space=vmem, size = 0x400, scoped, tag = 'output window, operand 0, single buffered']
    #allocation4 [shape = 's32[1]{0}', space=sflag, size = 0x4, scoped, tag = 'scoped memory for tpu_custom_call.1']
    %9 = vsyncpa [#allocation4], 0
    // Predicated region
    $region2: #{tpu_custom_call.1} parent=1 // pred_check
      _
    $region3: #{tpu_custom_call.1} parent=1 // pred_check_branch
      %11 = sbr.rel (0) target = $region5
    $region4: #{tpu_custom_call.1} parent=1 // pred_region
      _
    $region5: #{tpu_custom_call.1} parent=1 // pred_fallthru
      _
    // Predicated region
    $region6: #{tpu_custom_call.1} parent=1 // pred_check
      _
    $region7: #{tpu_custom_call.1} parent=1 // pred_check_branch
      %13 = sbr.rel (0) target = $region9
    $region8: #{tpu_custom_call.1} parent=1 // pred_region
      _
    $region9: #{tpu_custom_call.1} parent=1 // pred_fallthru
      _
    // Predicated region
    $region10: #{tpu_custom_call.1} parent=1 // pred_check
      _
    $region11: #{tpu_custom_call.1} parent=1 // pred_check_branch
      %15 = sbr.rel (0) target = $region13
    $region12: #{tpu_custom_call.1} parent=1 // pred_region
      _
    $region13: #{tpu_custom_call.1} parent=1 // pred_fallthru
      _
    %v16 = vld [vmem:[%s0] sm:$0xff]
    %v17 = vld [vmem:[%s0 + $0x8] sm:$0xff]
    %v18 = vld [vmem:[%s0 + $0x10] sm:$0x1]
    %v19 = vld [vmem:[%s1] sm:$0xff]
    %v20 = vld [vmem:[%s1 + $0x8] sm:$0xff]
    %v21 = vld [vmem:[%s1 + $0x10] sm:$0x1]
    %23 = vset.pattern.permute.xlu0 0
    %24 = vperm.xlu0 %23, %v19
    %v25 = vpop.permute.xlu0 %24
    %28 = vset.pattern.permute.xlu0 0
    %29 = vperm.xlu0 %28, %v20
    %v30 = vpop.permute.xlu0 %29
    %33 = vset.pattern.permute.xlu0 0
    %34 = vperm.xlu0 %33, %v21
    %v35 = vpop.permute.xlu0 %34
    %v37 = vmul.f32 %v16, %v25
    %v38 = vmul.f32 %v17, %v30
    %v39 = vmul.f32 %v18, %v35
    %v40 = vadd.f32 %v37, %v38
    %vm41 = vcmask 1040384
    %v42 = vsel %vm41, %v39, 0.0
    %v43 = vadd.f32 %v40, %v42
    %v44 = vrot.slane %v43, 4
    %v45 = vadd.f32 %v43, %v44
    %v46 = vrot.slane %v45, 2
    %v47 = vadd.f32 %v45, %v46
    %v48 = vrot.slane %v47, 1
    %v49 = vadd.f32 %v47, %v48
    %s50 = sld [smem:[#allocation2]]
    %v51 = vstv %s50
    %v52 = vadd.f32 %v49, %v51
    %53 = vst [vmem:[#allocation3] sm:$0x1] %v52
    // Predicated region
    $region14: #{tpu_custom_call.1} parent=1 // pred_check
      _
    $region15: #{tpu_custom_call.1} parent=1 // pred_check_branch
      %55 = sbr.rel (0) target = $region17
    $region16: #{tpu_custom_call.1} parent=1 // pred_region
      %s57 = ssub.s32 16, 16
      %58 = vsyncadd [#allocation4], %s57
      %s60 = sshll.u32 [#allocation3], 4
      %s61 = int_to_ptr.vmem [resolvable:$true] %s60
      %63 = dma.vmem_to_hbm [thread:$0]  %s61, 16, %s3, [#allocation4]
    $region17: #{tpu_custom_call.1} parent=1 // pred_fallthru
      _
    // Predicated region
    $region18: #{tpu_custom_call.1} parent=1 // pred_check
      _
    $region19: #{tpu_custom_call.1} parent=1 // pred_check_branch
      %65 = sbr.rel (0) target = $region21
    $region20: #{tpu_custom_call.1} parent=1 // pred_region
      %66 = dma.done [#allocation4], 16
    $region21: #{tpu_custom_call.1} parent=1 // pred_fallthru
      _
    %67 = vsyncpa [#allocation4], 1

</llo_original>
